<compile_context>
chip_gen: v5e
topology: v5e:2x2
jax: 0.10.0
libtpu: 0.0.40
codegen_flags: <defaults>
</compile_context>

<pallas_src>
import jax
import jax.numpy as jnp
from jax.experimental import pallas as pl
from jax.experimental.pallas import tpu as pltpu


_TILE_BYTES = 2 * 1024 * 1024  # per input tile; in+out, double-buffered -> ~8 MiB VMEM


def _drop_path_kernel(x_ref, scale_ref, o_ref):
    # x_ref: (bB, bF) or (bR, 128); scale_ref: (bB, 1) or (1, 128) -> broadcasts.
    o_ref[...] = x_ref[...] * scale_ref[...]


def _rdown(v, m):
    return (v // m) * m


def _rup(v, m):
    return ((v + m - 1) // m) * m


def _sublane_multiple(itemsize):
    # Dense native-tile sublane counts per dtype width.
    return {4: 8, 2: 16, 1: 32}.get(itemsize, 8)


def drop_path_pallas(x, drop_prob: float = 0.0, training: bool = False, key=None,
                     donate_x: bool = False):
    """Exact re-implementation of timm's drop_path forward (batch on axis 0)."""
    if drop_prob == 0.0 or not training:
        return x
    if key is None:
        # Silent PRNGKey(0) fallback would repeat the same mask every call.
        raise ValueError("drop_path_pallas requires an explicit PRNG key when "
                         "training with drop_prob > 0")

    keep_prob = 1.0 - drop_prob
    B = x.shape[0]
    orig_shape = x.shape
    x2d = x.reshape(B, -1)            # contiguous reshape -> free (no HBM copy)
    F = x2d.shape[1]
    itemsize = jnp.dtype(x2d.dtype).itemsize
    sub = _sublane_multiple(itemsize)

    # Per-sample mask, same math as timm: floor(keep_prob + U[0,1)) in x.dtype
    # (the mask is exactly 0/1 either way); 1/keep_prob is folded in (in f32,
    # then cast once) so the kernel is a single broadcasted multiply.
    u = jax.random.uniform(key, (B, 1), dtype=x.dtype)
    random_tensor = jnp.floor(keep_prob + u)
    scale = (random_tensor.astype(jnp.float32) / keep_prob).astype(x.dtype)

    io_aliases = {0: 0} if donate_x else {}
    cost = pl.CostEstimate(flops=B * F, transcendentals=0,
                           bytes_accessed=2 * B * F * itemsize + B * itemsize)
    cparams = pltpu.CompilerParams(
        dimension_semantics=("parallel", "parallel"),
        vmem_limit_bytes=32 * 1024 * 1024,
    )

    if B < sub and F % 128 == 0:
        # ---- small-batch, sublane-dense 3-D path: (B, R, 128) slab ----
        R = F // 128
        if R <= sub:
            bR = R
        else:
            budget = max(sub, _rdown(_TILE_BYTES // (128 * itemsize), sub))
            bR = min(_rdown(R, sub), budget)
        # v7x has 2 TensorCores: with B == 1 make sure the feature axis splits.
        if B == 1 and pl.cdiv(R, bR) < 2 and R >= 2 * sub:
            bR = _rup(pl.cdiv(R, 2), sub)

        x3 = x2d.reshape(B, R, 128)
        s3 = jnp.broadcast_to(scale.reshape(B, 1, 1), (B, 1, 128))
        grid = (B, pl.cdiv(R, bR))

        out = pl.pallas_call(
            _drop_path_kernel,
            out_shape=jax.ShapeDtypeStruct((B, R, 128), x2d.dtype),
            grid_spec=pltpu.PrefetchScalarGridSpec(
                num_scalar_prefetch=0,
                grid=grid,
                in_specs=[
                    pl.BlockSpec((None, bR, 128), lambda b, r: (b, r, 0)),
                    # Block index constant along the fast feature axis ->
                    # fetched once per sample, not per feature tile.
                    pl.BlockSpec((None, 1, 128), lambda b, r: (b, 0, 0)),
                ],
                out_specs=pl.BlockSpec((None, bR, 128), lambda b, r: (b, r, 0)),
            ),
            compiler_params=cparams,
            cost_estimate=cost,
            input_output_aliases=io_aliases,
        )(x3, s3)
        return out.reshape(orig_shape)

    # ---- general 2-D path: (B, F) with ragged last tiles masked by Pallas ----
    if F <= 128:
        bF = F
    else:
        lane_budget = max(128, _rdown(_TILE_BYTES // (sub * itemsize), 128))
        bF = min(_rdown(F, 128), lane_budget)
    if B < sub:
        bB = B
    else:
        row_budget = max(sub, _rdown(_TILE_BYTES // (bF * itemsize), sub))
        bB = min(_rdown(B, sub), row_budget)
    # v7x has 2 TensorCores: guarantee >= 2 blocks along a parallel axis when possible.
    if pl.cdiv(B, bB) * pl.cdiv(F, bF) < 2:
        if F >= 256:
            bF = _rup(pl.cdiv(F, 2), 128)
        elif B >= 2 * sub:
            bB = _rup(pl.cdiv(B, 2), sub)

    grid = (pl.cdiv(B, bB), pl.cdiv(F, bF))
    out2d = pl.pallas_call(
        _drop_path_kernel,
        out_shape=jax.ShapeDtypeStruct((B, F), x2d.dtype),
        grid_spec=pltpu.PrefetchScalarGridSpec(
            num_scalar_prefetch=0,
            grid=grid,
            in_specs=[
                pl.BlockSpec((bB, bF), lambda i, j: (i, j)),
                # Scale block index constant along the (fast) feature axis.
                pl.BlockSpec((bB, 1), lambda i, j: (i, 0)),
            ],
            out_specs=pl.BlockSpec((bB, bF), lambda i, j: (i, j)),
        ),
        compiler_params=cparams,
        cost_estimate=cost,
        input_output_aliases=io_aliases,
    )(x2d, scale)
    return out2d.reshape(orig_shape)


class DropPath:
    """JAX/Pallas counterpart of the PyTorch DropPath module."""

    def __init__(self, drop_prob=None):
        self.drop_prob = drop_prob
        self.training = True

    def __call__(self, x, key=None):
        p = 0.0 if self.drop_prob is None else self.drop_prob
        return drop_path_pallas(x, p, self.training, key=key)


def _timm_ref(x, drop_prob, key):
    """Pure-JAX reference with the same math as the PyTorch/timm forward."""
    keep_prob = 1.0 - drop_prob
    B = x.shape[0]
    u = jax.random.uniform(key, (B, 1), dtype=x.dtype)
    rt = jnp.floor(keep_prob + u).reshape((B,) + (1,) * (x.ndim - 1))
    return x / keep_prob * rt


if __name__ == "__main__":
    root = jax.random.PRNGKey(0)
    k_x, k_drop = jax.random.split(root)
    drop_prob = 0.25

    module = DropPath(drop_prob=drop_prob)
    module.training = True

    # 1) Small NCHW input (B=2 < 8, F=1024 multiple of 128) -> sublane-dense 3-D path.
    x = jax.random.normal(k_x, (2, 4, 16, 16), dtype=jnp.float32)
    out = jax.block_until_ready(module(x, key=k_drop))
    ref = _timm_ref(x, drop_prob, k_drop)
    assert out.shape == x.shape and out.dtype == x.dtype
    assert jnp.allclose(out, ref, rtol=1e-5, atol=1e-6)

    # 2) Ragged flattened feature axis (F=105 < 128) -> single-block 2-D path.
    x_r = jax.random.normal(k_x, (2, 3, 5, 7), dtype=jnp.float32)
    out_r = jax.block_until_ready(module(x_r, key=k_drop))
    assert jnp.allclose(out_r, _timm_ref(x_r, drop_prob, k_drop), rtol=1e-5, atol=1e-6)

    # 3) Larger batch (B=16, F=512) -> 2-D path; feature axis split for 2 parallel blocks.
    x_b = jax.random.normal(k_x, (16, 8, 8, 8), dtype=jnp.float32)
    out_b = jax.block_until_ready(module(x_b, key=k_drop))
    assert jnp.allclose(out_b, _timm_ref(x_b, drop_prob, k_drop), rtol=1e-5, atol=1e-6)

    # 4) Ragged feature tail (F=300 -> 256-lane tile + masked 44-lane tail), no pad/slice.
    x_t = jax.random.normal(k_x, (8, 3, 10, 10), dtype=jnp.float32)
    out_t = jax.block_until_ready(module(x_t, key=k_drop))
    assert jnp.allclose(out_t, _timm_ref(x_t, drop_prob, k_drop), rtol=1e-5, atol=1e-6)

    # 5) Eval mode / drop_prob=0 passthrough semantics (no key needed).
    module.training = False
    out_eval = jax.block_until_ready(module(x))
    assert jnp.array_equal(out_eval, x)

    print("KERNEL_OK")
</pallas_src>

<mosaic_0001>
module attributes {stable_mosaic.version = 11 : i64} {
  func.func @_drop_path_kernel(%arg0: i32, %arg1: i32, %arg2: memref<1x8x128xf32, #tpu.memory_space<vmem>>, %arg3: memref<1x1x128xf32, #tpu.memory_space<vmem>>, %arg4: memref<1x8x128xf32, #tpu.memory_space<vmem>>) attributes {dimension_semantics = [#tpu.dimension_semantics<parallel>, #tpu.dimension_semantics<parallel>], iteration_bounds = array<i64: 2, 1>, scalar_prefetch = 0 : i64, scratch_operands = 0 : i64, tpu.core_type = #tpu.core_type<tc>, window_params = [{transform_indices = @transform_0, window_bounds = array<i64: 1, 8, 128>}, {transform_indices = @transform_1, window_bounds = array<i64: 1, 1, 128>}, {transform_indices = @transform_2, window_bounds = array<i64: 1, 8, 128>}]} {
    %c0 = arith.constant 0 : index
    %c0_0 = arith.constant 0 : index
    %c0_1 = arith.constant 0 : index
    %0 = vector.load %arg2[%c0, %c0_0, %c0_1] : memref<1x8x128xf32, #tpu.memory_space<vmem>>, vector<1x8x128xf32>
    %1 = vector.shape_cast %0 : vector<1x8x128xf32> to vector<8x128xf32>
    %c0_2 = arith.constant 0 : index
    %c0_3 = arith.constant 0 : index
    %c0_4 = arith.constant 0 : index
    %2 = vector.load %arg3[%c0_2, %c0_3, %c0_4] : memref<1x1x128xf32, #tpu.memory_space<vmem>>, vector<1x1x128xf32>
    %3 = vector.shape_cast %2 : vector<1x1x128xf32> to vector<1x128xf32>
    %4 = vector.broadcast %3 : vector<1x128xf32> to vector<8x128xf32>
    %5 = arith.mulf %1, %4 : vector<8x128xf32>
    %c0_5 = arith.constant 0 : index
    %c0_6 = arith.constant 0 : index
    %c0_7 = arith.constant 0 : index
    %6 = vector.load %arg4[%c0_5, %c0_6, %c0_7] : memref<1x8x128xf32, #tpu.memory_space<vmem>>, vector<1x8x128xf32>
    %7 = vector.shape_cast %6 : vector<1x8x128xf32> to vector<8x128xf32>
    %8 = vector.shape_cast %5 : vector<8x128xf32> to vector<1x8x128xf32>
    tpu.vector_store %arg4[%c0_5, %c0_6, %c0_7], %8 {strides = array<i32>} : memref<1x8x128xf32, #tpu.memory_space<vmem>>, vector<1x8x128xf32>,
    return
  }
  func.func @transform_0(%arg0: i32, %arg1: i32) -> (i32, i32, i32) {
    %c0_i32 = arith.constant 0 : i32
    %c0_i32_0 = arith.constant 0 : i32
    return %arg0, %arg1, %c0_i32 : i32, i32, i32
  }
  func.func @transform_1(%arg0: i32, %arg1: i32) -> (i32, i32, i32) {
    %c0_i32 = arith.constant 0 : i32
    %c0_i32_0 = arith.constant 0 : i32
    %c0_i32_1 = arith.constant 0 : i32
    return %arg0, %c0_i32, %c0_i32_0 : i32, i32, i32
  }
  func.func @transform_2(%arg0: i32, %arg1: i32) -> (i32, i32, i32) {
    %c0_i32 = arith.constant 0 : i32
    %c0_i32_0 = arith.constant 0 : i32
    return %arg0, %arg1, %c0_i32 : i32, i32, i32
  }
}

</mosaic_0001>

<llo_original>
// kernel: tpu_custom_call.1
$region0: #{tpu_custom_call.1}
  #allocation0 [shape = 'u32[]', space=smem, size = 0x4, offset = 0x4, fixed_abs, tag = 'smem constant byte address 0x4 - core index']
  #allocation1 [shape = 'u32[72,128]{1,0:T(1,128)}', space=vmem, size = 0x9000, scoped, tag = 'internal scratch']
  %s0 = inlined_call_operand.hbm [shape: f32[2,8,128], index: 0, kind: input, shape index: {}]
  %s1 = inlined_call_operand.hbm [shape: f32[2,1,128], index: 1, kind: input, shape index: {}]
  %s2 = inlined_call_operand.hbm [shape: f32[2,8,128], index: 2, kind: output, shape index: {}]
  %s3 = sld [smem:[#allocation0]]
  $region49: #{tpu_custom_call.1} parent=0
    _
  %s5 = ssub.s32 1, %s3
  %s6 = scalar_select 0, %s5, %s3
  $region1: #{tpu_custom_call.1} parent=0
    #allocation2 [shape = 'u8[8192]{0}', space=vmem, size = 0x2000, scoped, tag = 'input window, operand 0']
    #allocation3 [shape = 's32[2]{0}', space=sflag, size = 0x8, scoped, tag = 'scoped memory for tpu_custom_call.1']
    #allocation4 [shape = 's32[2]{0}', space=sflag, size = 0x8, scoped, tag = 'scoped memory for tpu_custom_call.1']
    #allocation5 [shape = 'u8[1024]{0}', space=vmem, size = 0x400, scoped, tag = 'input window, operand 1']
    #allocation6 [shape = 's32[2]{0}', space=sflag, size = 0x8, scoped, tag = 'scoped memory for tpu_custom_call.1']
    #allocation7 [shape = 'u8[8192]{0}', space=vmem, size = 0x2000, scoped, tag = 'output window, operand 0']
    %7 = vsyncpa [#allocation3], 0
    %s8 = scalar_lea.sflag [#allocation3], 1
    %9 = vsyncpa %s8, 0
    %10 = vsyncpa [#allocation6], 0
    %s11 = scalar_lea.sflag [#allocation6], 1
    %12 = vsyncpa %s11, 0
    %13 = vsyncpa [#allocation4], 0
    %s14 = scalar_lea.sflag [#allocation4], 1
    %15 = vsyncpa %s14, 0
    loop: start=0, step=1, limit=4
    $region2: #{tpu_custom_call.1} parent=1 // loop_pre_header
      _
    $region3: #{tpu_custom_call.1} parent=1 // loop_header
      %s17 = sphi 0, %s21
      %p18 = scmp.ge.s32.totalorder %s17, 4
      %s24 = sphi 0, %s36
      %s25 = sphi 0, %s32
      %s26 = sphi 0, %s24
      %s27 = sphi 0, %s25
      %s28 = sphi 0, %s26
      %s29 = sphi 0, %s27
      %s41 = sphi 0, %s43
      %s44 = sphi 0, %s41
      %s45 = sphi 0, %s44
      %s61 = sphi 0, %s45
      %s67 = sphi 0, %s69
      %s70 = sphi 0, %s67
      %s71 = sphi 0, %s70
      %s87 = sphi 0, %s71
      %s95 = sphi 0, %s97
      %s98 = sphi 0, %s95
      %s99 = sphi 0, %s98
      %s115 = sphi 0, %s99
    $region4: #{tpu_custom_call.1} parent=1 // loop_header_branch
      %20 = sbr.rel (%p18) target = $region8
    $region5: #{tpu_custom_call.1} parent=1 // loop_body
      %s22 = ssub.s32 %s17, 1
      %s23 = ssub.s32 %s17, 2
      %s30 = sadd.s32 1, %s25
      %p31 = scmp.ge.s32.totalorder %s30, 1
      %s32 = scalar_select %p31, 0, %s30
      %s33 = sadd.s32 1, %s24
      %s34 = scalar_select %p31, %s33, %s24
      %p35 = scmp.ge.s32.totalorder %s34, 2
      %s36 = scalar_select %p35, 0, %s34
      %s37 = ssub.s32 %s24, %s36
      %s38 = ssub.s32 %s25, %s32
      %s39 = sor.u32 %s37, %s38
      %p40 = scmp.eq.s32.totalorder %s39, 0
      %s42 = sadd.s32 %s41, 1
      %s43 = scalar_select %p40, %s41, %s42
      %p46 = pneg %p40
      %p47 = scmp.eq.s32.totalorder %s17, 1
      %p48 = por %p46, %p47
      %p49 = scmp.ne.s32.totalorder %s41, %s44
      %p50 = scmp.eq.s32.totalorder %s17, 0
      %p51 = por %p49, %p50
      %p52 = scmp.ne.s32.totalorder %s41, %s44
      %p53 = scmp.eq.s32.totalorder %s22, 1
      %p54 = por %p52, %p53
      %p55 = scmp.ne.s32.totalorder %s44, %s45
      %p56 = scmp.eq.s32.totalorder %s22, 0
      %p57 = por %p55, %p56
      %p58 = scmp.ne.s32.totalorder %s44, %s45
      %p59 = scmp.eq.s32.totalorder %s23, 1
      %p60 = por %p58, %p59
      %p62 = scmp.ne.s32.totalorder %s45, %s61
      %p63 = scmp.eq.s32.totalorder %s23, 0
      %p64 = por %p62, %p63
      %s65 = ssub.s32 %s24, %s36
      %p66 = scmp.eq.s32.totalorder %s65, 0
      %s68 = sadd.s32 %s67, 1
      %s69 = scalar_select %p66, %s67, %s68
      %p72 = pneg %p66
      %p73 = scmp.eq.s32.totalorder %s17, 1
      %p74 = por %p72, %p73
      %p75 = scmp.ne.s32.totalorder %s67, %s70
      %p76 = scmp.eq.s32.totalorder %s17, 0
      %p77 = por %p75, %p76
      %p78 = scmp.ne.s32.totalorder %s67, %s70
      %p79 = scmp.eq.s32.totalorder %s22, 1
      %p80 = por %p78, %p79
      %p81 = scmp.ne.s32.totalorder %s70, %s71
      %p82 = scmp.eq.s32.totalorder %s22, 0
      %p83 = por %p81, %p82
      %p84 = scmp.ne.s32.totalorder %s70, %s71
      %p85 = scmp.eq.s32.totalorder %s23, 1
      %p86 = por %p84, %p85
      %p88 = scmp.ne.s32.totalorder %s71, %s87
      %p89 = scmp.eq.s32.totalorder %s23, 0
      %p90 = por %p88, %p89
      %s91 = ssub.s32 %s24, %s36
      %s92 = ssub.s32 %s25, %s32
      %s93 = sor.u32 %s91, %s92
      %p94 = scmp.eq.s32.totalorder %s93, 0
      %s96 = sadd.s32 %s95, 1
      %s97 = scalar_select %p94, %s95, %s96
      %p100 = pneg %p94
      %p101 = scmp.eq.s32.totalorder %s17, 1
      %p102 = por %p100, %p101
      %p103 = scmp.ne.s32.totalorder %s95, %s98
      %p104 = scmp.eq.s32.totalorder %s17, 0
      %p105 = por %p103, %p104
      %p106 = scmp.ne.s32.totalorder %s95, %s98
      %p107 = scmp.eq.s32.totalorder %s22, 1
      %p108 = por %p106, %p107
      %p109 = scmp.ne.s32.totalorder %s98, %s99
      %p110 = scmp.eq.s32.totalorder %s22, 0
      %p111 = por %p109, %p110
      %p112 = scmp.ne.s32.totalorder %s98, %s99
      %p113 = scmp.eq.s32.totalorder %s23, 1
      %p114 = por %p112, %p113
      %p116 = scmp.ne.s32.totalorder %s99, %s115
      %p117 = scmp.eq.s32.totalorder %s23, 0
      %p118 = por %p116, %p117
      %p119 = scmp.le.s32.totalorder 1, %s17
      %p120 = scmp.lt.s32.totalorder %s17, 3
      %p121 = pnand %p119, %p120
      %p122 = pneg %p121
      // Predicated region
      $region9: #{tpu_custom_call.1} parent=5 // pred_check
        _
      $region10: #{tpu_custom_call.1} parent=5 // pred_check_branch
        %124 = sbr.rel (%p121) target = $region12
      $region11: #{tpu_custom_call.1} parent=5 // pred_region
        %s125 = ssub.s32 %s17, 1
      $region12: #{tpu_custom_call.1} parent=5 // pred_fallthru
        _
      %p126 = scmp.lt.s32.totalorder %s17, 2
      // Predicated region
      $region13: #{tpu_custom_call.1} parent=5 // pred_check
        %p127 = pneg %p126
      $region14: #{tpu_custom_call.1} parent=5 // pred_check_branch
        %129 = sbr.rel (%p127) target = $region16
      $region15: #{tpu_custom_call.1} parent=5 // pred_region
        // Predicated region
        $region17: #{tpu_custom_call.1} parent=15 // pred_check
          %p130 = pneg %p51
        $region18: #{tpu_custom_call.1} parent=15 // pred_check_branch
          %132 = sbr.rel (%p130) target = $region20
        $region19: #{tpu_custom_call.1} parent=15 // pred_region
          %s133 = sand.u32 %s41, 1
          %s134 = scalar_lea.sflag [#allocation3], %s133
          %s135 = sand.u32 %s41, 1
          %s136 = smul.addr %s135, 8
          %s137 = scalar_lea.vmem [#allocation2], %s136
          %139 = vsyncadd %s134, 0
          %s140 = sadd.s32 %s25, %s24
          %s141 = smul.addr %s140, 8
          %s142 = scalar_lea.hbm %s0, %s141
          %s144 = sshll.u32 %s142, 4
          %s145 = int_to_ptr.hbm [resolvable:$true] %s144
          %s146 = sshll.u32 %s137, 4
          %s147 = int_to_ptr.vmem [resolvable:$true] %s146
          %149 = dma.hbm_to_vmem [thread:$0]  %s145, 128, %s147, %s134
        $region20: #{tpu_custom_call.1} parent=15 // pred_fallthru
          _
        // Predicated region
        $region21: #{tpu_custom_call.1} parent=15 // pred_check
          %p150 = pneg %p77
        $region22: #{tpu_custom_call.1} parent=15 // pred_check_branch
          %152 = sbr.rel (%p150) target = $region24
        $region23: #{tpu_custom_call.1} parent=15 // pred_region
          %s153 = sand.u32 %s67, 1
          %s154 = scalar_lea.sflag [#allocation6], %s153
          %s155 = sand.u32 %s67, 1
          %s156 = scalar_lea.vmem [#allocation5], %s155
          %158 = vsyncadd %s154, 0
          %s159 = scalar_lea.hbm %s1, %s24
          %s161 = sshll.u32 %s159, 4
          %s162 = int_to_ptr.hbm [resolvable:$true] %s161
          %s163 = sshll.u32 %s156, 4
          %s164 = int_to_ptr.vmem [resolvable:$true] %s163
          %166 = dma.hbm_to_vmem [thread:$0]  %s162, 16, %s164, %s154
        $region24: #{tpu_custom_call.1} parent=15 // pred_fallthru
          _
      $region16: #{tpu_custom_call.1} parent=5 // pred_fallthru
        _
      %p167 = scmp.le.s32.totalorder 1, %s17
      %p168 = scmp.lt.s32.totalorder %s17, 3
      %p169 = pnand %p167, %p168
      %p170 = pneg %p169
      // Predicated region
      $region25: #{tpu_custom_call.1} parent=5 // pred_check
        _
      $region26: #{tpu_custom_call.1} parent=5 // pred_check_branch
        %172 = sbr.rel (%p169) target = $region28
      $region27: #{tpu_custom_call.1} parent=5 // pred_region
        %s173 = ssub.s32 %s17, 1
        %s174 = sand.u32 %s44, 1
        %s175 = scalar_lea.sflag [#allocation3], %s174
        %s176 = sand.u32 %s44, 1
        %s177 = smul.addr %s176, 8
        %s178 = scalar_lea.vmem [#allocation2], %s177
        // Predicated region
        $region29: #{tpu_custom_call.1} parent=27 // pred_check
          %p179 = pneg %p57
        $region30: #{tpu_custom_call.1} parent=27 // pred_check_branch
          %181 = sbr.rel (%p179) target = $region32
        $region31: #{tpu_custom_call.1} parent=27 // pred_region
          %183 = dma.done %s175, 128
        $region32: #{tpu_custom_call.1} parent=27 // pred_fallthru
          _
        %s184 = sand.u32 %s70, 1
        %s185 = scalar_lea.sflag [#allocation6], %s184
        %s186 = sand.u32 %s70, 1
        %s187 = scalar_lea.vmem [#allocation5], %s186
        // Predicated region
        $region33: #{tpu_custom_call.1} parent=27 // pred_check
          %p188 = pneg %p83
        $region34: #{tpu_custom_call.1} parent=27 // pred_check_branch
          %190 = sbr.rel (%p188) target = $region36
        $region35: #{tpu_custom_call.1} parent=27 // pred_region
          %192 = dma.done %s185, 16
        $region36: #{tpu_custom_call.1} parent=27 // pred_fallthru
          _
        %s193 = sand.u32 %s44, 1
        %s194 = scalar_lea.sflag [#allocation3], %s193
        %s195 = sand.u32 %s44, 1
        %s196 = smul.addr %s195, 8
        %s197 = scalar_lea.vmem [#allocation2], %s196
        %p198 = pneg %p57
        %p199 = pneg %p54
        %s200 = sand.u32 %s70, 1
        %s201 = scalar_lea.sflag [#allocation6], %s200
        %s202 = sand.u32 %s70, 1
        %s203 = scalar_lea.vmem [#allocation5], %s202
        %p204 = pneg %p83
        %p205 = pneg %p80
        %p206 = pneg %p111
        %p207 = pneg %p108
        %s208 = sand.u32 %s98, 1
        %s209 = scalar_lea.sflag [#allocation4], %s208
        %s210 = sand.u32 %s98, 1
        %s211 = smul.addr %s210, 8
        %s212 = scalar_lea.vmem [#allocation7], %s211
        %v213 = vld [vmem:[%s178] sm:$0xff]
        %v214 = vld [vmem:[%s187] sm:$0x1]
        %v216 = vperm.slane %v214, 0
        %v218 = vmul.f32 %v213, %v216
        %219 = vst [vmem:[%s212] sm:$0xff] %v218
        %s220 = sand.u32 %s98, 1
        %s221 = scalar_lea.sflag [#allocation4], %s220
        %s222 = sand.u32 %s98, 1
        %s223 = smul.addr %s222, 8
        %s224 = scalar_lea.vmem [#allocation7], %s223
        // Predicated region
        $region37: #{tpu_custom_call.1} parent=27 // pred_check
          %p225 = pneg %p108
        $region38: #{tpu_custom_call.1} parent=27 // pred_check_branch
          %227 = sbr.rel (%p225) target = $region40
        $region39: #{tpu_custom_call.1} parent=27 // pred_region
          %229 = vsyncadd %s221, 0
          %s230 = sadd.s32 %s27, %s26
          %s231 = smul.addr %s230, 8
          %s232 = scalar_lea.hbm %s2, %s231
          %s234 = sshll.u32 %s224, 4
          %s235 = int_to_ptr.vmem [resolvable:$true] %s234
          %s236 = sshll.u32 %s232, 4
          %s237 = int_to_ptr.hbm [resolvable:$true] %s236
          %239 = dma.vmem_to_hbm [thread:$0]  %s235, 128, %s237, %s221
        $region40: #{tpu_custom_call.1} parent=27 // pred_fallthru
          _
      $region28: #{tpu_custom_call.1} parent=5 // pred_fallthru
        _
      %p240 = scmp.le.s32.totalorder 2, %s17
      // Predicated region
      $region41: #{tpu_custom_call.1} parent=5 // pred_check
        %p241 = pneg %p240
      $region42: #{tpu_custom_call.1} parent=5 // pred_check_branch
        %243 = sbr.rel (%p241) target = $region44
      $region43: #{tpu_custom_call.1} parent=5 // pred_region
        %s244 = ssub.s32 %s17, 2
        // Predicated region
        $region45: #{tpu_custom_call.1} parent=43 // pred_check
          %p245 = pneg %p114
        $region46: #{tpu_custom_call.1} parent=43 // pred_check_branch
          %247 = sbr.rel (%p245) target = $region48
        $region47: #{tpu_custom_call.1} parent=43 // pred_region
          %s248 = sand.u32 %s99, 1
          %s249 = scalar_lea.sflag [#allocation4], %s248
          %s250 = sand.u32 %s99, 1
          %s251 = smul.addr %s250, 8
          %s252 = scalar_lea.vmem [#allocation7], %s251
          %254 = dma.done %s249, 128
        $region48: #{tpu_custom_call.1} parent=43 // pred_fallthru
          _
      $region44: #{tpu_custom_call.1} parent=5 // pred_fallthru
        _
    $region6: #{tpu_custom_call.1} parent=1 // loop_footer
      %s21 = sadd.s32 1, %s17
    $region7: #{tpu_custom_call.1} parent=1 // loop_footer_branch
      %16 = sbr.rel target = $region3
    $region8: #{tpu_custom_call.1} parent=1 // loop_exit
      _
    %255 = vsyncpa [#allocation3], 1
    %s256 = scalar_lea.sflag [#allocation3], 1
    %257 = vsyncpa %s256, 1
    %258 = vsyncpa [#allocation6], 1
    %s259 = scalar_lea.sflag [#allocation6], 1
    %260 = vsyncpa %s259, 1
    %261 = vsyncpa [#allocation4], 1
    %s262 = scalar_lea.sflag [#allocation4], 1
    %263 = vsyncpa %s262, 1

</llo_original>
